<compile_context>
chip_gen: v7x
topology: tpu7x:2x2x1
jax: 0.10.0
libtpu: 0.0.40
codegen_flags: <defaults>
</compile_context>

<pallas_src>
import functools

import jax
import jax.numpy as jnp
from jax.experimental import pallas as pl
from jax.experimental.pallas import tpu as pltpu


def _round_up(n, m):
    return ((n + m - 1) // m) * m


def actor_discrete_kernel(x_ref,
                          w0_ref, b0_ref,
                          w1_ref, b1_ref,
                          w2_ref, b2_ref,
                          o_ref):
    """One batch tile of the fused MLP.

    Weights are already (in, out) (no in-kernel transposes) and may be bf16; activations are
    cast to the weight dtype only for the MXU dots, all elementwise math stays f32.
    """
    x = x_ref[...]

    # fc0 + tanh
    w0 = w0_ref[...]
    h = jnp.dot(x.astype(w0.dtype), w0, preferred_element_type=jnp.float32) + b0_ref[...]
    h = jnp.tanh(h)

    # fc1 + tanh
    w1 = w1_ref[...]
    h = jnp.dot(h.astype(w1.dtype), w1, preferred_element_type=jnp.float32) + b1_ref[...]
    h = jnp.tanh(h)

    # final fc (real action_dim width — no lane padding, so only real bytes go back to HBM)
    w2 = w2_ref[...]
    logits = jnp.dot(h.astype(w2.dtype), w2, preferred_element_type=jnp.float32) + b2_ref[...]

    # numerically stable softmax over the action dim; exact divide so rows sum to 1 exactly
    m = jnp.max(logits, axis=-1, keepdims=True)
    e = jnp.exp(logits - m)
    denom = jnp.sum(e, axis=-1, keepdims=True)
    o_ref[...] = (e / denom).astype(o_ref.dtype)


@functools.partial(jax.jit, static_argnames=("block_batch", "use_bf16_matmul"))
def actor_discrete_forward(x, params, *, block_batch=2048, use_bf16_matmul=True):
    """x: (batch, state_dim) f32.  params: PyTorch layout [(w(out,in), b(1,out)), ...]."""
    (w0, b0), (w1, b1), (w2, b2) = params
    batch, state_dim = x.shape
    h0 = w0.shape[0]
    h1 = w1.shape[0]
    action_dim = w2.shape[0]

    # ---- one-time (per call, outside the kernel) parameter prep ----
    mx_dtype = jnp.bfloat16 if use_bf16_matmul else jnp.float32
    w0t = w0.T.astype(mx_dtype)          # (state_dim, h0)
    w1t = w1.T.astype(mx_dtype)          # (h0, h1)
    w2t = w2.T.astype(mx_dtype)          # (h1, action_dim)  -- no lane padding
    # biases stay f32: the add and everything after it runs on the f32 VPU/EUP path.

    # ---- batch tiling ----
    tb = min(_round_up(block_batch, 8), _round_up(batch, 8))
    if batch >= 16:
        # Keep the "parallel" grid >= 2 steps so both v7x TensorCores get work.
        tb = min(tb, _round_up(pl.cdiv(batch, 2), 8))
    batch_pad = _round_up(batch, tb)
    xp = jnp.pad(x, ((0, batch_pad - batch), (0, 0)))   # garbage rows sliced off afterwards
    grid = (batch_pad // tb,)

    resident = lambda i: (0, 0)        # same block every step -> weights stay VMEM-resident
    in_specs = [
        pl.BlockSpec((tb, state_dim), lambda i: (i, 0)),
        pl.BlockSpec((state_dim, h0), resident),
        pl.BlockSpec((1, h0), resident),
        pl.BlockSpec((h0, h1), resident),
        pl.BlockSpec((1, h1), resident),
        pl.BlockSpec((h1, action_dim), resident),
        pl.BlockSpec((1, action_dim), resident),
    ]
    out_specs = pl.BlockSpec((tb, action_dim), lambda i: (i, 0))

    # ---- right-sized scoped-VMEM budget (v7x has only 64 MiB physical; don't hog it) ----
    f32 = 4
    w_bytes = (state_dim * h0 + h0 * h1 + h1 * action_dim) * mx_dtype.dtype.itemsize
    b_bytes = (h0 + h1 + action_dim) * f32
    io_bytes = 2 * tb * (state_dim + action_dim) * f32           # double-buffered x / out
    inter_bytes = 6 * tb * max(h0, h1) * f32                     # h, casts, logits, exp, ...
    need = io_bytes + inter_bytes + 2 * (w_bytes + b_bytes)
    vmem_limit = int(min(max(2 * need, 8 << 20), 32 << 20))

    flops = 2 * batch_pad * (state_dim * h0 + h0 * h1 + h1 * action_dim)
    transcendentals = batch_pad * (h0 + h1 + action_dim)
    bytes_accessed = f32 * batch_pad * (state_dim + action_dim) + w_bytes + b_bytes

    # TODO(synk): for very large batches, fold G rows into lanes with block-diagonal weights
    # (review opt #6) to fill MXU K/N and full VPU/EUP vregs; needs a per-group-of-4 softmax.
    out = pl.pallas_call(
        actor_discrete_kernel,
        out_shape=jax.ShapeDtypeStruct((batch_pad, action_dim), jnp.float32),
        grid=grid,
        in_specs=in_specs,
        out_specs=out_specs,
        compiler_params=pltpu.CompilerParams(
            dimension_semantics=("parallel",),
            vmem_limit_bytes=vmem_limit),
        cost_estimate=pl.CostEstimate(flops=flops,
                                      transcendentals=transcendentals,
                                      bytes_accessed=bytes_accessed),
    )(xp, w0t, b0, w1t, b1, w2t, b2)

    return out[:batch, :]


def make_params(key, state_dim, action_dim, emb_dim):
    """Orthogonal init (gain=1) for weights, zeros for biases, mirroring init_weights().
    Weights kept in PyTorch nn.Linear layout (out, in); biases kept 2-D (1, out)."""
    sizes = [state_dim] + list(emb_dim) + [action_dim]
    orth = jax.nn.initializers.orthogonal(scale=1.0)
    params = []
    for i in range(len(sizes) - 1):
        key, sub = jax.random.split(key)
        fan_in, fan_out = sizes[i], sizes[i + 1]
        w = orth(sub, (fan_out, fan_in), jnp.float32)
        b = jnp.zeros((1, fan_out), jnp.float32)
        params.append((w, b))
    return params


def reference_forward(x, params):
    (w0, b0), (w1, b1), (w2, b2) = params
    h = jnp.tanh(x @ w0.T + b0)
    h = jnp.tanh(h @ w1.T + b1)
    logits = h @ w2.T + b2
    return jax.nn.softmax(logits, axis=-1)


if __name__ == "__main__":
    key = jax.random.PRNGKey(0)
    batch, state_dim, action_dim = 8, 16, 4
    emb_dim = [32, 32]

    key, kx = jax.random.split(key)
    x = jax.random.normal(kx, (batch, state_dim), jnp.float32)
    params = make_params(key, state_dim, action_dim, emb_dim)
    ref = reference_forward(x, params)

    # 1) pure-f32 path: module semantics
    out_f32 = jax.block_until_ready(
        actor_discrete_forward(x, params, use_bf16_matmul=False))
    assert out_f32.shape == (batch, action_dim)
    assert jnp.allclose(out_f32, ref, atol=2e-2, rtol=2e-2), "f32 mismatch vs reference"
    assert jnp.allclose(jnp.sum(out_f32, axis=-1), 1.0, atol=1e-5), "rows must sum to 1"

    # 2) default bf16-MXU-operand path: looser vs f32 reference; exact divide keeps sums at 1
    out = jax.block_until_ready(actor_discrete_forward(x, params))
    assert out.shape == (batch, action_dim)
    assert jnp.allclose(out, ref, atol=3e-2, rtol=3e-2), "bf16 mismatch vs reference"
    assert jnp.allclose(jnp.sum(out, axis=-1), 1.0, atol=1e-5), "rows must sum to 1"

    # 3) ragged batch exercising multiple grid steps
    key, kx2 = jax.random.split(key)
    x2 = jax.random.normal(kx2, (300, state_dim), jnp.float32)
    out2 = jax.block_until_ready(actor_discrete_forward(x2, params, block_batch=64))
    ref2 = reference_forward(x2, params)
    assert out2.shape == (300, action_dim)
    assert jnp.allclose(out2, ref2, atol=3e-2, rtol=3e-2), "gridded mismatch vs reference"
    assert jnp.allclose(jnp.sum(out2, axis=-1), 1.0, atol=1e-5), "rows must sum to 1"

    print("KERNEL_OK")
</pallas_src>

<mosaic_0001>
module attributes {stable_mosaic.version = 11 : i64} {
  func.func @actor_discrete_kernel(%arg0: i32, %arg1: memref<8x16xf32, #tpu.memory_space<vmem>>, %arg2: memref<16x32xf32, #tpu.memory_space<vmem>>, %arg3: memref<1x32xf32, #tpu.memory_space<vmem>>, %arg4: memref<32x32xf32, #tpu.memory_space<vmem>>, %arg5: memref<1x32xf32, #tpu.memory_space<vmem>>, %arg6: memref<32x4xf32, #tpu.memory_space<vmem>>, %arg7: memref<1x4xf32, #tpu.memory_space<vmem>>, %arg8: memref<8x4xf32, #tpu.memory_space<vmem>>) attributes {dimension_semantics = [#tpu.dimension_semantics<parallel>], iteration_bounds = array<i64: 1>, scalar_prefetch = 0 : i64, scratch_operands = 0 : i64, tpu.core_type = #tpu.core_type<tc>, window_params = [{transform_indices = @transform_0, window_bounds = array<i64: 8, 16>}, {pipeline_mode = #tpu.pipeline_mode<synchronous>, transform_indices = @transform_1, window_bounds = array<i64: 16, 32>}, {pipeline_mode = #tpu.pipeline_mode<synchronous>, transform_indices = @transform_2, window_bounds = array<i64: 1, 32>}, {pipeline_mode = #tpu.pipeline_mode<synchronous>, transform_indices = @transform_3, window_bounds = array<i64: 32, 32>}, {pipeline_mode = #tpu.pipeline_mode<synchronous>, transform_indices = @transform_4, window_bounds = array<i64: 1, 32>}, {pipeline_mode = #tpu.pipeline_mode<synchronous>, transform_indices = @transform_5, window_bounds = array<i64: 32, 4>}, {pipeline_mode = #tpu.pipeline_mode<synchronous>, transform_indices = @transform_6, window_bounds = array<i64: 1, 4>}, {transform_indices = @transform_7, window_bounds = array<i64: 8, 4>}]} {
    %c0 = arith.constant 0 : index
    %c0_0 = arith.constant 0 : index
    %0 = vector.load %arg1[%c0, %c0_0] : memref<8x16xf32, #tpu.memory_space<vmem>>, vector<8x16xf32>
    %c0_1 = arith.constant 0 : index
    %c0_2 = arith.constant 0 : index
    %1 = vector.load %arg2[%c0_1, %c0_2] : memref<16x32xf32, #tpu.memory_space<vmem>>, vector<16x32xf32>
    %cst = arith.constant dense<0.000000e+00> : vector<8x32xf32>
    %2 = tpu.matmul %0, %1, %cst {dimension_numbers = #tpu.dot_dimension_numbers<[1], [0], [0], [1], [0, 0, 1, 1], [], []>} : vector<8x16xf32>, vector<16x32xf32>, vector<8x32xf32> -> vector<8x32xf32>
    %c0_3 = arith.constant 0 : index
    %c0_4 = arith.constant 0 : index
    %3 = vector.load %arg3[%c0_3, %c0_4] : memref<1x32xf32, #tpu.memory_space<vmem>>, vector<1x32xf32>
    %4 = vector.broadcast %3 : vector<1x32xf32> to vector<8x32xf32>
    %5 = arith.addf %2, %4 : vector<8x32xf32>
    %6 = math.tanh %5 : vector<8x32xf32>
    %c0_5 = arith.constant 0 : index
    %c0_6 = arith.constant 0 : index
    %7 = vector.load %arg4[%c0_5, %c0_6] : memref<32x32xf32, #tpu.memory_space<vmem>>, vector<32x32xf32>
    %cst_7 = arith.constant dense<0.000000e+00> : vector<8x32xf32>
    %8 = tpu.matmul %6, %7, %cst_7 {dimension_numbers = #tpu.dot_dimension_numbers<[1], [0], [0], [1], [0, 0, 1, 1], [], []>} : vector<8x32xf32>, vector<32x32xf32>, vector<8x32xf32> -> vector<8x32xf32>
    %c0_8 = arith.constant 0 : index
    %c0_9 = arith.constant 0 : index
    %9 = vector.load %arg5[%c0_8, %c0_9] : memref<1x32xf32, #tpu.memory_space<vmem>>, vector<1x32xf32>
    %10 = vector.broadcast %9 : vector<1x32xf32> to vector<8x32xf32>
    %11 = arith.addf %8, %10 : vector<8x32xf32>
    %12 = math.tanh %11 : vector<8x32xf32>
    %c0_10 = arith.constant 0 : index
    %c0_11 = arith.constant 0 : index
    %13 = vector.load %arg6[%c0_10, %c0_11] : memref<32x4xf32, #tpu.memory_space<vmem>>, vector<32x4xf32>
    %cst_12 = arith.constant dense<0.000000e+00> : vector<8x4xf32>
    %14 = tpu.matmul %12, %13, %cst_12 {dimension_numbers = #tpu.dot_dimension_numbers<[1], [0], [0], [1], [0, 0, 1, 1], [], []>} : vector<8x32xf32>, vector<32x4xf32>, vector<8x4xf32> -> vector<8x4xf32>
    %c0_13 = arith.constant 0 : index
    %c0_14 = arith.constant 0 : index
    %15 = vector.load %arg7[%c0_13, %c0_14] : memref<1x4xf32, #tpu.memory_space<vmem>>, vector<1x4xf32>
    %16 = vector.broadcast %15 : vector<1x4xf32> to vector<8x4xf32>
    %17 = arith.addf %14, %16 : vector<8x4xf32>
    %cst_15 = arith.constant dense<0xFF800000> : vector<8xf32>
    %18 = vector.multi_reduction <maximumf>, %17, %cst_15 [1] : vector<8x4xf32> to vector<8xf32>
    %19 = vector.shape_cast %18 : vector<8xf32> to vector<8x1xf32>
    %20 = vector.broadcast %19 : vector<8x1xf32> to vector<8x4xf32>
    %21 = arith.subf %17, %20 : vector<8x4xf32>
    %22 = math.exp %21 : vector<8x4xf32>
    %cst_16 = arith.constant dense<0.000000e+00> : vector<8xf32>
    %23 = vector.multi_reduction <add>, %22, %cst_16 [1] : vector<8x4xf32> to vector<8xf32>
    %24 = vector.shape_cast %23 : vector<8xf32> to vector<8x1xf32>
    %25 = vector.broadcast %24 : vector<8x1xf32> to vector<8x4xf32>
    %26 = arith.divf %22, %25 : vector<8x4xf32>
    %c0_17 = arith.constant 0 : index
    %c0_18 = arith.constant 0 : index
    %27 = vector.load %arg8[%c0_17, %c0_18] : memref<8x4xf32, #tpu.memory_space<vmem>>, vector<8x4xf32>
    tpu.vector_store %arg8[%c0_17, %c0_18], %26 {strides = array<i32>} : memref<8x4xf32, #tpu.memory_space<vmem>>, vector<8x4xf32>,
    return
  }
  func.func @transform_0(%arg0: i32) -> (i32, i32) {
    %c0_i32 = arith.constant 0 : i32
    %c0_i32_0 = arith.constant 0 : i32
    return %arg0, %c0_i32 : i32, i32
  }
  func.func @transform_1(%arg0: i32) -> (i32, i32) {
    %c0_i32 = arith.constant 0 : i32
    %c0_i32_0 = arith.constant 0 : i32
    %c0_i32_1 = arith.constant 0 : i32
    return %c0_i32, %c0_i32_0 : i32, i32
  }
  func.func @transform_2(%arg0: i32) -> (i32, i32) {
    %c0_i32 = arith.constant 0 : i32
    %c0_i32_0 = arith.constant 0 : i32
    %c0_i32_1 = arith.constant 0 : i32
    return %c0_i32, %c0_i32_0 : i32, i32
  }
  func.func @transform_3(%arg0: i32) -> (i32, i32) {
    %c0_i32 = arith.constant 0 : i32
    %c0_i32_0 = arith.constant 0 : i32
    %c0_i32_1 = arith.constant 0 : i32
    return %c0_i32, %c0_i32_0 : i32, i32
  }
  func.func @transform_4(%arg0: i32) -> (i32, i32) {
    %c0_i32 = arith.constant 0 : i32
    %c0_i32_0 = arith.constant 0 : i32
    %c0_i32_1 = arith.constant 0 : i32
    return %c0_i32, %c0_i32_0 : i32, i32
  }
  func.func @transform_5(%arg0: i32) -> (i32, i32) {
    %c0_i32 = arith.constant 0 : i32
    %c0_i32_0 = arith.constant 0 : i32
    %c0_i32_1 = arith.constant 0 : i32
    return %c0_i32, %c0_i32_0 : i32, i32
  }
  func.func @transform_6(%arg0: i32) -> (i32, i32) {
    %c0_i32 = arith.constant 0 : i32
    %c0_i32_0 = arith.constant 0 : i32
    %c0_i32_1 = arith.constant 0 : i32
    return %c0_i32, %c0_i32_0 : i32, i32
  }
  func.func @transform_7(%arg0: i32) -> (i32, i32) {
    %c0_i32 = arith.constant 0 : i32
    %c0_i32_0 = arith.constant 0 : i32
    return %arg0, %c0_i32 : i32, i32
  }
}

</mosaic_0001>

<llo_original>
// kernel: actor_discrete_forward.1
$region0: #{actor_discrete_forward.1}
  #allocation0 [shape = 'u32[]', space=smem, size = 0x4, offset = 0x4, fixed_abs, tag = 'smem constant byte address 0x4 - core index']
  #allocation1 [shape = 'u32[144,128]{1,0:T(1,128)}', space=vmem, size = 0x12000, scoped, tag = 'internal scratch']
  %s0 = inlined_call_operand.vmem [shape: f32[8,16], index: 0, kind: input, shape index: {}]
  %s1 = inlined_call_operand.vmem [shape: f32[16,32], index: 1, kind: input, shape index: {}]
  %s2 = inlined_call_operand.vmem [shape: f32[1,32], index: 2, kind: input, shape index: {}]
  %s3 = inlined_call_operand.vmem [shape: f32[32,32], index: 3, kind: input, shape index: {}]
  %s4 = inlined_call_operand.vmem [shape: f32[1,32], index: 4, kind: input, shape index: {}]
  %s5 = inlined_call_operand.vmem [shape: f32[32,4], index: 5, kind: input, shape index: {}]
  %s6 = inlined_call_operand.vmem [shape: f32[1,4], index: 6, kind: input, shape index: {}]
  %s7 = inlined_call_operand.vmem [shape: f32[8,4], index: 7, kind: output, shape index: {}]
  %s8 = sld [smem:[#allocation0]]
  $region38: #{actor_discrete_forward.1} parent=0
    _
  %s10 = ssub.s32 1, %s8
  %s11 = scalar_select 0, %s10, %s8
  // Predicated region
  $region2: #{actor_discrete_forward.1} parent=0 // pred_check
    _
  $region3: #{actor_discrete_forward.1} parent=0 // pred_check_branch
    %13 = sbr.rel (0) target = $region5
  $region4: #{actor_discrete_forward.1} parent=0 // pred_region
    _
  $region5: #{actor_discrete_forward.1} parent=0 // pred_fallthru
    _
  // Predicated region
  $region6: #{actor_discrete_forward.1} parent=0 // pred_check
    _
  $region7: #{actor_discrete_forward.1} parent=0 // pred_check_branch
    %15 = sbr.rel (0) target = $region9
  $region8: #{actor_discrete_forward.1} parent=0 // pred_region
    _
  $region9: #{actor_discrete_forward.1} parent=0 // pred_fallthru
    _
  // Predicated region
  $region10: #{actor_discrete_forward.1} parent=0 // pred_check
    _
  $region11: #{actor_discrete_forward.1} parent=0 // pred_check_branch
    %17 = sbr.rel (0) target = $region13
  $region12: #{actor_discrete_forward.1} parent=0 // pred_region
    _
  $region13: #{actor_discrete_forward.1} parent=0 // pred_fallthru
    _
  // Predicated region
  $region14: #{actor_discrete_forward.1} parent=0 // pred_check
    _
  $region15: #{actor_discrete_forward.1} parent=0 // pred_check_branch
    %19 = sbr.rel (0) target = $region17
  $region16: #{actor_discrete_forward.1} parent=0 // pred_region
    _
  $region17: #{actor_discrete_forward.1} parent=0 // pred_fallthru
    _
  // Predicated region
  $region18: #{actor_discrete_forward.1} parent=0 // pred_check
    _
  $region19: #{actor_discrete_forward.1} parent=0 // pred_check_branch
    %21 = sbr.rel (0) target = $region21
  $region20: #{actor_discrete_forward.1} parent=0 // pred_region
    _
  $region21: #{actor_discrete_forward.1} parent=0 // pred_fallthru
    _
  // Predicated region
  $region22: #{actor_discrete_forward.1} parent=0 // pred_check
    _
  $region23: #{actor_discrete_forward.1} parent=0 // pred_check_branch
    %23 = sbr.rel (0) target = $region25
  $region24: #{actor_discrete_forward.1} parent=0 // pred_region
    _
  $region25: #{actor_discrete_forward.1} parent=0 // pred_fallthru
    _
  // Predicated region
  $region26: #{actor_discrete_forward.1} parent=0 // pred_check
    _
  $region27: #{actor_discrete_forward.1} parent=0 // pred_check_branch
    %25 = sbr.rel (0) target = $region29
  $region28: #{actor_discrete_forward.1} parent=0 // pred_region
    _
  $region29: #{actor_discrete_forward.1} parent=0 // pred_fallthru
    _
  %v26 = vld [vmem:[%s0] sm:$0xff]
  %v27 = vld [vmem:[%s1] sm:$0xff]
  %v28 = vld [vmem:[%s1 + $0x8] sm:$0xff]
  %v29 = vld [vmem:[%s2] sm:$0x1]
  %v31 = vlaneseq
  %v32 = vshrl.u32 %v31, 7
  %v33 = vsub.s32 0, %v32
  %v34 = vrot.slane %v29, %v33
  %vm36 = vcmask 130048
  %v38 = vsel %vm36, %v26, 0
  %40 = vmatprep.subr.mxu0 0.0
  %41 = vmatpush1.msra.mxu0 %v27
  %42 = vmatprep.subr.mxu0 0.0
  %43 = vmatpush1.msra.mxu0 %v28
  %44 = vmatprep.subr.mxu0 0.0
  %45 = vmatpush1.msra.mxu0 0.0
  %46 = vmatprep.subr.mxu0 0.0
  %47 = vmatpush1.msra.mxu0 0.0
  %48 = vmatprep.subr.mxu0 0.0
  %49 = vmatpush1.msra.mxu0 0.0
  %50 = vmatprep.subr.mxu0 0.0
  %51 = vmatpush1.msra.mxu0 0.0
  %52 = vmatprep.subr.mxu0 0.0
  %53 = vmatpush1.msra.mxu0 0.0
  %54 = vmatprep.subr.mxu0 0.0
  %55 = vmatpush1.msra.mxu0 0.0
  %56 = vmatprep.subr.mxu0 0.0
  %57 = vmatpush1.msra.mxu0 0.0
  %58 = vmatprep.subr.mxu0 0.0
  %59 = vmatpush1.msra.mxu0 0.0
  %60 = vmatprep.subr.mxu0 0.0
  %61 = vmatpush1.msra.mxu0 0.0
  %62 = vmatprep.subr.mxu0 0.0
  %63 = vmatpush1.msra.mxu0 0.0
  %64 = vmatprep.subr.mxu0 0.0
  %65 = vmatpush1.msra.mxu0 0.0
  %66 = vmatprep.subr.mxu0 0.0
  %67 = vmatpush1.msra.mxu0 0.0
  %68 = vmatprep.subr.mxu0 0.0
  %69 = vmatpush1.msra.mxu0 0.0
  %70 = vmatprep.subr.mxu0 0.0
  %71 = vmatpush1.msra.mxu0 0.0
  %72 = vmatprep.subr.mxu0 0.0
  %73 = vmatpush1.msra.mxu0 0.0
  %74 = vmatprep.subr.mxu0 0.0
  %75 = vmatpush1.msra.mxu0 0.0
  %76 = vmatprep.subr.mxu0 0.0
  %77 = vmatpush1.msra.mxu0 0.0
  %78 = vmatprep.subr.mxu0 0.0
  %79 = vmatpush1.msra.mxu0 0.0
  %80 = vmatprep.subr.mxu0 0.0
  %81 = vmatpush1.msra.mxu0 0.0
  %82 = vmatprep.subr.mxu0 0.0
  %83 = vmatpush1.msra.mxu0 0.0
  %84 = vmatprep.subr.mxu0 0.0
  %85 = vmatpush1.msra.mxu0 0.0
  %86 = vmatprep.subr.mxu0 0.0
  %87 = vmatpush1.msra.mxu0 0.0
  %88 = vmatprep.subr.mxu0 0.0
  %89 = vmatpush1.msra.mxu0 0.0
  %90 = vmatprep.subr.mxu0 0.0
  %91 = vmatpush1.msra.mxu0 0.0
  %92 = vmatprep.subr.mxu0 0.0
  %93 = vmatpush1.msra.mxu0 0.0
  %94 = vmatprep.subr.mxu0 0.0
  %95 = vmatpush1.msra.mxu0 0.0
  %96 = vmatprep.subr.mxu0 0.0
  %97 = vmatpush1.msra.mxu0 0.0
  %98 = vmatprep.subr.mxu0 0.0
  %99 = vmatpush1.msra.mxu0 0.0
  %100 = vmatprep.subr.mxu0 0.0
  %101 = vmatpush1.msra.mxu0 0.0
  %102 = vmatprep.subr.mxu0 0.0
  %103 = vmatpush1.msra.mxu0 0.0
  %104 = vmatprep.mubr.f32.mxu0 0.0
  %105 = vmatmul.mubr.f32.gmra.mrb[0].mxu0 %v38
  %v106 = vpop.f32.mrb[0].mxu0
  %v107 = vadd.f32 %v34, %v106
  %v108 = vpop.f32.mrb[0].mxu0
  %109 = vdwg.mxu0
  %v110 = vtanh.pop %v107
  %v111 = vld [vmem:[%s3] sm:$0xff]
  %v112 = vld [vmem:[%s3 + $0x8] sm:$0xff]
  %v113 = vld [vmem:[%s3 + $0x10] sm:$0xff]
  %v114 = vld [vmem:[%s3 + $0x18] sm:$0xff]
  %v115 = vld [vmem:[%s4] sm:$0x1]
  %v117 = vlaneseq
  %v118 = vshrl.u32 %v117, 7
  %v119 = vsub.s32 0, %v118
  %v120 = vrot.slane %v115, %v119
  %vm122 = vcmask 261120
  %v124 = vsel %vm122, %v110, 0
  %126 = vmatprep.subr.mxu0 0.0
  %127 = vmatpush1.msra.mxu0 %v111
  %128 = vmatprep.subr.mxu0 0.0
  %129 = vmatpush1.msra.mxu0 %v112
  %130 = vmatprep.subr.mxu0 0.0
  %131 = vmatpush1.msra.mxu0 %v113
  %132 = vmatprep.subr.mxu0 0.0
  %133 = vmatpush1.msra.mxu0 %v114
  %134 = vmatprep.subr.mxu0 0.0
  %135 = vmatpush1.msra.mxu0 0.0
  %136 = vmatprep.subr.mxu0 0.0
  %137 = vmatpush1.msra.mxu0 0.0
  %138 = vmatprep.subr.mxu0 0.0
  %139 = vmatpush1.msra.mxu0 0.0
  %140 = vmatprep.subr.mxu0 0.0
  %141 = vmatpush1.msra.mxu0 0.0
  %142 = vmatprep.subr.mxu0 0.0
  %143 = vmatpush1.msra.mxu0 0.0
  %144 = vmatprep.subr.mxu0 0.0
  %145 = vmatpush1.msra.mxu0 0.0
  %146 = vmatprep.subr.mxu0 0.0
  %147 = vmatpush1.msra.mxu0 0.0
  %148 = vmatprep.subr.mxu0 0.0
  %149 = vmatpush1.msra.mxu0 0.0
  %150 = vmatprep.subr.mxu0 0.0
  %151 = vmatpush1.msra.mxu0 0.0
  %152 = vmatprep.subr.mxu0 0.0
  %153 = vmatpush1.msra.mxu0 0.0
  %154 = vmatprep.subr.mxu0 0.0
  %155 = vmatpush1.msra.mxu0 0.0
  %156 = vmatprep.subr.mxu0 0.0
  %157 = vmatpush1.msra.mxu0 0.0
  %158 = vmatprep.subr.mxu0 0.0
  %159 = vmatpush1.msra.mxu0 0.0
  %160 = vmatprep.subr.mxu0 0.0
  %161 = vmatpush1.msra.mxu0 0.0
  %162 = vmatprep.subr.mxu0 0.0
  %163 = vmatpush1.msra.mxu0 0.0
  %164 = vmatprep.subr.mxu0 0.0
  %165 = vmatpush1.msra.mxu0 0.0
  %166 = vmatprep.subr.mxu0 0.0
  %167 = vmatpush1.msra.mxu0 0.0
  %168 = vmatprep.subr.mxu0 0.0
  %169 = vmatpush1.msra.mxu0 0.0
  %170 = vmatprep.subr.mxu0 0.0
  %171 = vmatpush1.msra.mxu0 0.0
  %172 = vmatprep.subr.mxu0 0.0
  %173 = vmatpush1.msra.mxu0 0.0
  %174 = vmatprep.subr.mxu0 0.0
  %175 = vmatpush1.msra.mxu0 0.0
  %176 = vmatprep.subr.mxu0 0.0
  %177 = vmatpush1.msra.mxu0 0.0
  %178 = vmatprep.subr.mxu0 0.0
  %179 = vmatpush1.msra.mxu0 0.0
  %180 = vmatprep.subr.mxu0 0.0
  %181 = vmatpush1.msra.mxu0 0.0
  %182 = vmatprep.subr.mxu0 0.0
  %183 = vmatpush1.msra.mxu0 0.0
  %184 = vmatprep.subr.mxu0 0.0
  %185 = vmatpush1.msra.mxu0 0.0
  %186 = vmatprep.subr.mxu0 0.0
  %187 = vmatpush1.msra.mxu0 0.0
  %188 = vmatprep.subr.mxu0 0.0
  %189 = vmatpush1.msra.mxu0 0.0
  %190 = vmatprep.mubr.f32.mxu0 0.0
  %191 = vmatmul.mubr.f32.gmra.mrb[0].mxu0 %v124
  %v192 = vpop.f32.mrb[0].mxu0
  %v193 = vadd.f32 %v120, %v192
  %v194 = vpop.f32.mrb[0].mxu0
  %195 = vdwg.mxu0
  %v196 = vtanh.pop %v193
  %v197 = vld [vmem:[%s5] sm:$0xff]
  %v198 = vld [vmem:[%s5 + $0x8] sm:$0xff]
  %v199 = vld [vmem:[%s5 + $0x10] sm:$0xff]
  %v200 = vld [vmem:[%s5 + $0x18] sm:$0xff]
  %v201 = vld [vmem:[%s6] sm:$0x1]
  %v203 = vlaneseq
  %v204 = vshrl.u32 %v203, 7
  %v205 = vsub.s32 0, %v204
  %v206 = vrot.slane %v201, %v205
  %v209 = vsel %vm122, %v196, 0
  %211 = vmatprep.subr.mxu0 0.0
  %212 = vmatpush1.msra.mxu0 %v197
  %213 = vmatprep.subr.mxu0 0.0
  %214 = vmatpush1.msra.mxu0 %v198
  %215 = vmatprep.subr.mxu0 0.0
  %216 = vmatpush1.msra.mxu0 %v199
  %217 = vmatprep.subr.mxu0 0.0
  %218 = vmatpush1.msra.mxu0 %v200
  %219 = vmatprep.subr.mxu0 0.0
  %220 = vmatpush1.msra.mxu0 0.0
  %221 = vmatprep.subr.mxu0 0.0
  %222 = vmatpush1.msra.mxu0 0.0
  %223 = vmatprep.subr.mxu0 0.0
  %224 = vmatpush1.msra.mxu0 0.0
  %225 = vmatprep.subr.mxu0 0.0
  %226 = vmatpush1.msra.mxu0 0.0
  %227 = vmatprep.subr.mxu0 0.0
  %228 = vmatpush1.msra.mxu0 0.0
  %229 = vmatprep.subr.mxu0 0.0
  %230 = vmatpush1.msra.mxu0 0.0
  %231 = vmatprep.subr.mxu0 0.0
  %232 = vmatpush1.msra.mxu0 0.0
  %233 = vmatprep.subr.mxu0 0.0
  %234 = vmatpush1.msra.mxu0 0.0
  %235 = vmatprep.subr.mxu0 0.0
  %236 = vmatpush1.msra.mxu0 0.0
  %237 = vmatprep.subr.mxu0 0.0
  %238 = vmatpush1.msra.mxu0 0.0
  %239 = vmatprep.subr.mxu0 0.0
  %240 = vmatpush1.msra.mxu0 0.0
  %241 = vmatprep.subr.mxu0 0.0
  %242 = vmatpush1.msra.mxu0 0.0
  %243 = vmatprep.subr.mxu0 0.0
  %244 = vmatpush1.msra.mxu0 0.0
  %245 = vmatprep.subr.mxu0 0.0
  %246 = vmatpush1.msra.mxu0 0.0
  %247 = vmatprep.subr.mxu0 0.0
  %248 = vmatpush1.msra.mxu0 0.0
  %249 = vmatprep.subr.mxu0 0.0
  %250 = vmatpush1.msra.mxu0 0.0
  %251 = vmatprep.subr.mxu0 0.0
  %252 = vmatpush1.msra.mxu0 0.0
  %253 = vmatprep.subr.mxu0 0.0
  %254 = vmatpush1.msra.mxu0 0.0
  %255 = vmatprep.subr.mxu0 0.0
  %256 = vmatpush1.msra.mxu0 0.0
  %257 = vmatprep.subr.mxu0 0.0
  %258 = vmatpush1.msra.mxu0 0.0
  %259 = vmatprep.subr.mxu0 0.0
  %260 = vmatpush1.msra.mxu0 0.0
  %261 = vmatprep.subr.mxu0 0.0
  %262 = vmatpush1.msra.mxu0 0.0
  %263 = vmatprep.subr.mxu0 0.0
  %264 = vmatpush1.msra.mxu0 0.0
  %265 = vmatprep.subr.mxu0 0.0
  %266 = vmatpush1.msra.mxu0 0.0
  %267 = vmatprep.subr.mxu0 0.0
  %268 = vmatpush1.msra.mxu0 0.0
  %269 = vmatprep.subr.mxu0 0.0
  %270 = vmatpush1.msra.mxu0 0.0
  %271 = vmatprep.subr.mxu0 0.0
  %272 = vmatpush1.msra.mxu0 0.0
  %273 = vmatprep.subr.mxu0 0.0
  %274 = vmatpush1.msra.mxu0 0.0
  %275 = vmatprep.mubr.f32.mxu0 0.0
  %276 = vmatmul.mubr.f32.gmra.mrb[0].mxu0 %v209
  %v277 = vpop.f32.mrb[0].mxu0
  %v278 = vadd.f32 %v206, %v277
  %v279 = vpop.f32.mrb[0].mxu0
  %280 = vdwg.mxu0
  %vm281 = vcmask 31744
  %v282 = vsel %vm281, %v278, -inf
  %283 = vmax.xlane.f32.xlu0 %v282
  %v284 = vpop.xlane.xlu0 %283
  %v285 = vsub.f32 %v278, %v284
  %v286 = vmul.f32 %v285, 1.442695
  %v287 = vpow.pop %v286
  %v288 = vsel %vm281, %v287, 0.0
  %289 = vadd.xlane.f32.xlu0 %v288
  %v290 = vpop.xlane.xlu0 %289
  %v291 = vrcp.pop %v290
  %v292 = vmul.f32 %v287, %v291
  %293 = vst.msk [vmem:[%s7] sm:$0xff] %vm281, %v292
  // Predicated region
  $region30: #{actor_discrete_forward.1} parent=0 // pred_check
    _
  $region31: #{actor_discrete_forward.1} parent=0 // pred_check_branch
    %295 = sbr.rel (0) target = $region33
  $region32: #{actor_discrete_forward.1} parent=0 // pred_region
    _
  $region33: #{actor_discrete_forward.1} parent=0 // pred_fallthru
    _
  // Predicated region
  $region34: #{actor_discrete_forward.1} parent=0 // pred_check
    _
  $region35: #{actor_discrete_forward.1} parent=0 // pred_check_branch
    %297 = sbr.rel (0) target = $region37
  $region36: #{actor_discrete_forward.1} parent=0 // pred_region
    _
  $region37: #{actor_discrete_forward.1} parent=0 // pred_fallthru
    _

</llo_original>
